<compile_context>
chip_gen: v7x
topology: tpu7x:2x2x1
jax: 0.10.0
libtpu: 0.0.40
codegen_flags: <defaults>
</compile_context>

<pallas_src>
import math

import jax
import jax.numpy as jnp
from jax import lax
from jax.experimental import pallas as pl
from jax.experimental.pallas import tpu as pltpu


# ---------------------------------------------------------------------------
# Exact (erf-based) GELU, matching nn.GELU() default.
# erf via Abramowitz & Stegun 7.1.26 (|abs err| < 1.5e-7). The reciprocal in
# the rational variable `t` goes to the EUP (approx vrcp) + one Newton step,
# so the VALU only sees the polynomial.
# ---------------------------------------------------------------------------
def _erf(x):
    ax = jnp.abs(x)
    d = 1.0 + 0.3275911 * ax
    t = pl.reciprocal(d, approx=True)      # EUP slot (12-bit)
    t = t * (2.0 - d * t)                  # one Newton step -> ~f32 accurate
    poly = t * (0.254829592 + t * (-0.284496736 + t * (1.421413741
              + t * (-1.453152027 + t * 1.061405429))))
    y = 1.0 - poly * jnp.exp(-ax * ax)     # exp also on the EUP
    return jnp.where(x >= 0, y, -y)


def _gelu_exact(x):
    return 0.5 * x * (1.0 + _erf(x * (1.0 / math.sqrt(2.0))))


# ---------------------------------------------------------------------------
# Fused MLP kernel: one token-block per grid step, both matmuls on the MXU.
# Hidden activation (bm, H) never leaves VMEM.
# ---------------------------------------------------------------------------
def _mlp_kernel(x_ref, w1_ref, b1_ref, w2_ref, b2_ref, o_ref):
    # MXU dots in stored dtype; f32 accumulation via preferred_element_type.
    x = x_ref[...].astype(w1_ref.dtype)                      # no-op if dtypes match
    h = jnp.dot(x, w1_ref[...], preferred_element_type=jnp.float32)   # (bm, H) f32
    h = h + b1_ref[...].astype(jnp.float32)
    h = _gelu_exact(h)                                       # f32 VPU/EUP math
    y = jnp.dot(h.astype(w2_ref.dtype), w2_ref[...],
                preferred_element_type=jnp.float32)          # (bm, N) f32
    y = y + b2_ref[...].astype(jnp.float32)
    o_ref[...] = y.astype(o_ref.dtype)


def _round_up(a, b):
    return pl.cdiv(a, b) * b


def mlp_forward(x, params, *, block_m=256):
    """x: (..., in_features). params: PyTorch-layout tensors:
       w1 (hidden, in), b1 (hidden,), w2 (out, hidden), b2 (out,).
       Weights may be stored in bf16; they are fed to the MXU unchanged."""
    w1, b1, w2, b2 = params["w1"], params["b1"], params["w2"], params["b2"]
    K = x.shape[-1]
    H = w1.shape[0]
    N = w2.shape[0]
    lead = x.shape[:-1]

    x2 = x.reshape(-1, K)
    M = x2.shape[0]

    # Lane-dense weights/bias: feature dims on the last (lane) axis. One-time
    # host-side transpose; inside the kernel both dots are plain MXU matmuls.
    w1t = jnp.transpose(w1)          # (K, H)
    w2t = jnp.transpose(w2)          # (H, N)
    b1r = b1.reshape(1, H)
    b2r = b2.reshape(1, N)

    # Token-dim tiling:
    #  * M <= 8: single full-extent block (block dim == array dim is legal).
    #  * else: multiple of 8, capped at block_m, chosen so the grid has >= 2
    #    steps (megacore sharding on v7x). Pallas masks any partial tail block,
    #    so no host-side padding is needed.
    if M <= 8:
        bm = M
    else:
        bm = min(block_m, _round_up(pl.cdiv(M, 2), 8))
    grid = (pl.cdiv(M, bm),)

    itemsize = x2.dtype.itemsize
    cost = pl.CostEstimate(
        flops=2 * M * (K * H + H * N),
        transcendentals=2 * M * H,  # vrcp + exp per hidden element
        bytes_accessed=(M * K * itemsize
                        + K * H * w1t.dtype.itemsize + H * b1.dtype.itemsize
                        + H * N * w2t.dtype.itemsize + N * b2.dtype.itemsize
                        + M * N * itemsize),
    )

    out = pl.pallas_call(
        _mlp_kernel,
        out_shape=jax.ShapeDtypeStruct((M, N), x.dtype),
        grid=grid,
        in_specs=[
            pl.BlockSpec((bm, K), lambda i: (i, 0)),
            pl.BlockSpec((K, H), lambda i: (0, 0)),   # grid-invariant weights
            pl.BlockSpec((1, H), lambda i: (0, 0)),
            pl.BlockSpec((H, N), lambda i: (0, 0)),
            pl.BlockSpec((1, N), lambda i: (0, 0)),
        ],
        out_specs=pl.BlockSpec((bm, N), lambda i: (i, 0)),
        compiler_params=pltpu.CompilerParams(
            dimension_semantics=("parallel",),
            vmem_limit_bytes=64 * 1024 * 1024),
        cost_estimate=cost,
    )(x2, w1t, b1r, w2t, b2r)

    return out.reshape(*lead, N)


# ---------------------------------------------------------------------------
# Pure-JAX reference (exact GELU, highest-precision matmuls).
# ---------------------------------------------------------------------------
def mlp_ref(x, params):
    w1, b1, w2, b2 = params["w1"], params["b1"], params["w2"], params["b2"]
    h = jnp.dot(x, w1.T, precision=lax.Precision.HIGHEST) + b1
    h = jax.nn.gelu(h, approximate=False)
    y = jnp.dot(h, w2.T, precision=lax.Precision.HIGHEST) + b2
    return y


# ---------------------------------------------------------------------------
# Deterministic init mimicking nn.Linear defaults: U(-1/sqrt(fan_in), +...).
# ---------------------------------------------------------------------------
def _linear_init(kw, kb, fan_in, fan_out):
    bound = 1.0 / math.sqrt(fan_in)
    w = jax.random.uniform(kw, (fan_out, fan_in), jnp.float32, -bound, bound)
    b = jax.random.uniform(kb, (fan_out,), jnp.float32, -bound, bound)
    return w, b


if __name__ == "__main__":
    # Small shapes consistent with the module: batch=2, seq=8,
    # in_features=32, hidden_features=64, out_features=32.
    B, S, in_f, hid_f, out_f = 2, 8, 32, 64, 32

    key = jax.random.PRNGKey(0)
    kx, k1, k2, k3, k4 = jax.random.split(key, 5)

    x = jax.random.normal(kx, (B, S, in_f), jnp.float32)
    w1, b1 = _linear_init(k1, k2, in_f, hid_f)
    w2, b2 = _linear_init(k3, k4, hid_f, out_f)
    params = dict(w1=w1, b1=b1, w2=w2, b2=b2)

    out = jax.jit(mlp_forward)(x, params)
    out = jax.block_until_ready(out)

    ref = jax.block_until_ready(mlp_ref(x, params))
    max_err = float(jnp.max(jnp.abs(out - ref)))
    assert out.shape == (B, S, out_f), out.shape
    assert max_err < 2e-4, f"mismatch vs reference: {max_err}"

    print("KERNEL_OK")
</pallas_src>

<mosaic_0001>
module attributes {stable_mosaic.version = 11 : i64} {
  func.func @_mlp_kernel(%arg0: i32, %arg1: memref<8x32xf32, #tpu.memory_space<vmem>>, %arg2: memref<32x64xf32, #tpu.memory_space<vmem>>, %arg3: memref<1x64xf32, #tpu.memory_space<vmem>>, %arg4: memref<64x32xf32, #tpu.memory_space<vmem>>, %arg5: memref<1x32xf32, #tpu.memory_space<vmem>>, %arg6: memref<8x32xf32, #tpu.memory_space<vmem>>) attributes {dimension_semantics = [#tpu.dimension_semantics<parallel>], iteration_bounds = array<i64: 2>, scalar_prefetch = 0 : i64, scratch_operands = 0 : i64, tpu.core_type = #tpu.core_type<tc>, window_params = [{transform_indices = @transform_0, window_bounds = array<i64: 8, 32>}, {pipeline_mode = #tpu.pipeline_mode<synchronous>, transform_indices = @transform_1, window_bounds = array<i64: 32, 64>}, {pipeline_mode = #tpu.pipeline_mode<synchronous>, transform_indices = @transform_2, window_bounds = array<i64: 1, 64>}, {pipeline_mode = #tpu.pipeline_mode<synchronous>, transform_indices = @transform_3, window_bounds = array<i64: 64, 32>}, {pipeline_mode = #tpu.pipeline_mode<synchronous>, transform_indices = @transform_4, window_bounds = array<i64: 1, 32>}, {transform_indices = @transform_5, window_bounds = array<i64: 8, 32>}]} {
    %c0 = arith.constant 0 : index
    %c0_0 = arith.constant 0 : index
    %0 = vector.load %arg1[%c0, %c0_0] : memref<8x32xf32, #tpu.memory_space<vmem>>, vector<8x32xf32>
    %c0_1 = arith.constant 0 : index
    %c0_2 = arith.constant 0 : index
    %1 = vector.load %arg2[%c0_1, %c0_2] : memref<32x64xf32, #tpu.memory_space<vmem>>, vector<32x64xf32>
    %cst = arith.constant dense<0.000000e+00> : vector<8x64xf32>
    %2 = tpu.matmul %0, %1, %cst {dimension_numbers = #tpu.dot_dimension_numbers<[1], [0], [0], [1], [0, 0, 1, 1], [], []>} : vector<8x32xf32>, vector<32x64xf32>, vector<8x64xf32> -> vector<8x64xf32>
    %c0_3 = arith.constant 0 : index
    %c0_4 = arith.constant 0 : index
    %3 = vector.load %arg3[%c0_3, %c0_4] : memref<1x64xf32, #tpu.memory_space<vmem>>, vector<1x64xf32>
    %4 = vector.broadcast %3 : vector<1x64xf32> to vector<8x64xf32>
    %5 = arith.addf %2, %4 : vector<8x64xf32>
    %cst_5 = arith.constant 5.000000e-01 : f32
    %6 = vector.broadcast %cst_5 : f32 to vector<8x64xf32>
    %7 = arith.mulf %6, %5 : vector<8x64xf32>
    %cst_6 = arith.constant 0.707106769 : f32
    %8 = vector.broadcast %cst_6 : f32 to vector<8x64xf32>
    %9 = arith.mulf %5, %8 : vector<8x64xf32>
    %10 = math.absf %9 : vector<8x64xf32>
    %cst_7 = arith.constant 0.327591091 : f32
    %11 = vector.broadcast %cst_7 : f32 to vector<8x64xf32>
    %12 = arith.mulf %11, %10 : vector<8x64xf32>
    %cst_8 = arith.constant 1.000000e+00 : f32
    %13 = vector.broadcast %cst_8 : f32 to vector<8x64xf32>
    %14 = arith.addf %13, %12 : vector<8x64xf32>
    %15 = tpu.reciprocal %14 {approx = true} : vector<8x64xf32> -> vector<8x64xf32>
    %16 = arith.mulf %14, %15 : vector<8x64xf32>
    %cst_9 = arith.constant 2.000000e+00 : f32
    %17 = vector.broadcast %cst_9 : f32 to vector<8x64xf32>
    %18 = arith.subf %17, %16 : vector<8x64xf32>
    %19 = arith.mulf %15, %18 : vector<8x64xf32>
    %cst_10 = arith.constant 1.06140542 : f32
    %20 = vector.broadcast %cst_10 : f32 to vector<8x64xf32>
    %21 = arith.mulf %19, %20 : vector<8x64xf32>
    %cst_11 = arith.constant -1.45315206 : f32
    %22 = vector.broadcast %cst_11 : f32 to vector<8x64xf32>
    %23 = arith.addf %22, %21 : vector<8x64xf32>
    %24 = arith.mulf %19, %23 : vector<8x64xf32>
    %cst_12 = arith.constant 1.42141378 : f32
    %25 = vector.broadcast %cst_12 : f32 to vector<8x64xf32>
    %26 = arith.addf %25, %24 : vector<8x64xf32>
    %27 = arith.mulf %19, %26 : vector<8x64xf32>
    %cst_13 = arith.constant -0.284496725 : f32
    %28 = vector.broadcast %cst_13 : f32 to vector<8x64xf32>
    %29 = arith.addf %28, %27 : vector<8x64xf32>
    %30 = arith.mulf %19, %29 : vector<8x64xf32>
    %cst_14 = arith.constant 0.254829586 : f32
    %31 = vector.broadcast %cst_14 : f32 to vector<8x64xf32>
    %32 = arith.addf %31, %30 : vector<8x64xf32>
    %33 = arith.mulf %19, %32 : vector<8x64xf32>
    %cst_15 = arith.constant 0.000000e+00 : f32
    %34 = vector.broadcast %cst_15 : f32 to vector<8x64xf32>
    %35 = arith.subf %34, %10 : vector<8x64xf32>
    %36 = arith.mulf %35, %10 : vector<8x64xf32>
    %37 = math.exp %36 : vector<8x64xf32>
    %38 = arith.mulf %33, %37 : vector<8x64xf32>
    %cst_16 = arith.constant 1.000000e+00 : f32
    %39 = vector.broadcast %cst_16 : f32 to vector<8x64xf32>
    %40 = arith.subf %39, %38 : vector<8x64xf32>
    %cst_17 = arith.constant 0.000000e+00 : f32
    %41 = vector.broadcast %cst_17 : f32 to vector<8x64xf32>
    %42 = arith.cmpf oge, %9, %41 : vector<8x64xf32>
    %cst_18 = arith.constant 0.000000e+00 : f32
    %43 = vector.broadcast %cst_18 : f32 to vector<8x64xf32>
    %44 = arith.subf %43, %40 : vector<8x64xf32>
    %45 = arith.select %42, %40, %44 : vector<8x64xi1>, vector<8x64xf32>
    %cst_19 = arith.constant 1.000000e+00 : f32
    %46 = vector.broadcast %cst_19 : f32 to vector<8x64xf32>
    %47 = arith.addf %46, %45 : vector<8x64xf32>
    %48 = arith.mulf %7, %47 : vector<8x64xf32>
    %c0_20 = arith.constant 0 : index
    %c0_21 = arith.constant 0 : index
    %49 = vector.load %arg4[%c0_20, %c0_21] : memref<64x32xf32, #tpu.memory_space<vmem>>, vector<64x32xf32>
    %cst_22 = arith.constant dense<0.000000e+00> : vector<8x32xf32>
    %50 = tpu.matmul %48, %49, %cst_22 {dimension_numbers = #tpu.dot_dimension_numbers<[1], [0], [0], [1], [0, 0, 1, 1], [], []>} : vector<8x64xf32>, vector<64x32xf32>, vector<8x32xf32> -> vector<8x32xf32>
    %c0_23 = arith.constant 0 : index
    %c0_24 = arith.constant 0 : index
    %51 = vector.load %arg5[%c0_23, %c0_24] : memref<1x32xf32, #tpu.memory_space<vmem>>, vector<1x32xf32>
    %52 = vector.broadcast %51 : vector<1x32xf32> to vector<8x32xf32>
    %53 = arith.addf %50, %52 : vector<8x32xf32>
    %c0_25 = arith.constant 0 : index
    %c0_26 = arith.constant 0 : index
    %54 = vector.load %arg6[%c0_25, %c0_26] : memref<8x32xf32, #tpu.memory_space<vmem>>, vector<8x32xf32>
    tpu.vector_store %arg6[%c0_25, %c0_26], %53 {strides = array<i32>} : memref<8x32xf32, #tpu.memory_space<vmem>>, vector<8x32xf32>,
    return
  }
  func.func @transform_0(%arg0: i32) -> (i32, i32) {
    %c0_i32 = arith.constant 0 : i32
    %c0_i32_0 = arith.constant 0 : i32
    return %arg0, %c0_i32 : i32, i32
  }
  func.func @transform_1(%arg0: i32) -> (i32, i32) {
    %c0_i32 = arith.constant 0 : i32
    %c0_i32_0 = arith.constant 0 : i32
    %c0_i32_1 = arith.constant 0 : i32
    return %c0_i32, %c0_i32_0 : i32, i32
  }
  func.func @transform_2(%arg0: i32) -> (i32, i32) {
    %c0_i32 = arith.constant 0 : i32
    %c0_i32_0 = arith.constant 0 : i32
    %c0_i32_1 = arith.constant 0 : i32
    return %c0_i32, %c0_i32_0 : i32, i32
  }
  func.func @transform_3(%arg0: i32) -> (i32, i32) {
    %c0_i32 = arith.constant 0 : i32
    %c0_i32_0 = arith.constant 0 : i32
    %c0_i32_1 = arith.constant 0 : i32
    return %c0_i32, %c0_i32_0 : i32, i32
  }
  func.func @transform_4(%arg0: i32) -> (i32, i32) {
    %c0_i32 = arith.constant 0 : i32
    %c0_i32_0 = arith.constant 0 : i32
    %c0_i32_1 = arith.constant 0 : i32
    return %c0_i32, %c0_i32_0 : i32, i32
  }
  func.func @transform_5(%arg0: i32) -> (i32, i32) {
    %c0_i32 = arith.constant 0 : i32
    %c0_i32_0 = arith.constant 0 : i32
    return %arg0, %c0_i32 : i32, i32
  }
}

</mosaic_0001>

<llo_original>
// kernel: mlp_forward.1
$region0: #{mlp_forward.1}
  #allocation0 [shape = 'u32[]', space=smem, size = 0x4, offset = 0x4, fixed_abs, tag = 'smem constant byte address 0x4 - core index']
  #allocation1 [shape = 'u32[144,128]{1,0:T(1,128)}', space=vmem, size = 0x12000, scoped, tag = 'internal scratch']
  %s0 = inlined_call_operand.hbm [shape: f32[16,32], index: 0, kind: input, shape index: {}]
  %s1 = inlined_call_operand.hbm [shape: f32[32,64], index: 1, kind: input, shape index: {}]
  %s2 = inlined_call_operand.hbm [shape: f32[1,64], index: 2, kind: input, shape index: {}]
  %s3 = inlined_call_operand.hbm [shape: f32[64,32], index: 3, kind: input, shape index: {}]
  %s4 = inlined_call_operand.hbm [shape: f32[1,32], index: 4, kind: input, shape index: {}]
  %s5 = inlined_call_operand.hbm [shape: f32[16,32], index: 5, kind: output, shape index: {}]
  %s6 = sld [smem:[#allocation0]]
  $region73: #{mlp_forward.1} parent=0
    _
  %s8 = ssub.s32 1, %s6
  %s9 = scalar_select 0, %s8, %s6
  $region1: #{mlp_forward.1} parent=0
    #allocation2 [shape = 'u8[8192]{0}', space=vmem, size = 0x2000, scoped, tag = 'input window, operand 0']
    #allocation3 [shape = 's32[2]{0}', space=sflag, size = 0x8, scoped, tag = 'scoped memory for mlp_forward.1']
    #allocation4 [shape = 's32[2]{0}', space=sflag, size = 0x8, scoped, tag = 'scoped memory for mlp_forward.1']
    #allocation5 [shape = 'u8[16384]{0}', space=vmem, size = 0x4000, scoped, tag = 'input window, operand 1, single buffered']
    #allocation6 [shape = 's32[1]{0}', space=sflag, size = 0x4, scoped, tag = 'scoped memory for mlp_forward.1']
    #allocation7 [shape = 'u8[512]{0}', space=vmem, size = 0x400, scoped, tag = 'input window, operand 2, single buffered']
    #allocation8 [shape = 'u8[32768]{0}', space=vmem, size = 0x8000, scoped, tag = 'input window, operand 3, single buffered']
    #allocation9 [shape = 's32[1]{0}', space=sflag, size = 0x4, scoped, tag = 'scoped memory for mlp_forward.1']
    #allocation10 [shape = 'u8[512]{0}', space=vmem, size = 0x400, scoped, tag = 'input window, operand 4, single buffered']
    #allocation11 [shape = 'u8[8192]{0}', space=vmem, size = 0x2000, scoped, tag = 'output window, operand 0']
    %10 = vsyncpa [#allocation3], 0
    %s11 = scalar_lea.sflag [#allocation3], 1
    %12 = vsyncpa %s11, 0
    %13 = vsyncpa [#allocation6], 0
    %14 = vsyncpa [#allocation9], 0
    %15 = vsyncpa [#allocation4], 0
    %s16 = scalar_lea.sflag [#allocation4], 1
    %17 = vsyncpa %s16, 0
    loop: start=0, step=1, limit=4
    $region2: #{mlp_forward.1} parent=1 // loop_pre_header
      _
    $region3: #{mlp_forward.1} parent=1 // loop_header
      %s19 = sphi 0, %s23
      %p20 = scmp.ge.s32.totalorder %s19, 4
      %s29 = sphi 0, %s31
      %s32 = sphi 0, %s29
      %s33 = sphi 0, %s32
      %s49 = sphi 0, %s33
      %s53 = sphi 0, %s53
      %s55 = sphi 0, %s53
      %s56 = sphi 0, %s55
      %s70 = sphi 0, %s56
      %s74 = sphi 0, %s74
      %s76 = sphi 0, %s74
      %s77 = sphi 0, %s76
      %s91 = sphi 0, %s77
      %s95 = sphi 0, %s95
      %s97 = sphi 0, %s95
      %s98 = sphi 0, %s97
      %s112 = sphi 0, %s98
      %s116 = sphi 0, %s116
      %s118 = sphi 0, %s116
      %s119 = sphi 0, %s118
      %s133 = sphi 0, %s119
      %s139 = sphi 0, %s141
      %s142 = sphi 0, %s139
      %s143 = sphi 0, %s142
      %s159 = sphi 0, %s143
    $region4: #{mlp_forward.1} parent=1 // loop_header_branch
      %22 = sbr.rel (%p20) target = $region8
    $region5: #{mlp_forward.1} parent=1 // loop_body
      %s24 = ssub.s32 %s19, 1
      %s25 = ssub.s32 %s19, 2
      %s26 = sadd.s32 %s19, 1
      %s27 = ssub.s32 %s19, %s26
      %p28 = scmp.eq.s32.totalorder %s27, 0
      %s30 = sadd.s32 %s29, 1
      %s31 = scalar_select %p28, %s29, %s30
      %p34 = pneg %p28
      %p35 = scmp.eq.s32.totalorder %s19, 1
      %p36 = por %p34, %p35
      %p37 = scmp.ne.s32.totalorder %s29, %s32
      %p38 = scmp.eq.s32.totalorder %s19, 0
      %p39 = por %p37, %p38
      %p40 = scmp.ne.s32.totalorder %s29, %s32
      %p41 = scmp.eq.s32.totalorder %s24, 1
      %p42 = por %p40, %p41
      %p43 = scmp.ne.s32.totalorder %s32, %s33
      %p44 = scmp.eq.s32.totalorder %s24, 0
      %p45 = por %p43, %p44
      %p46 = scmp.ne.s32.totalorder %s32, %s33
      %p47 = scmp.eq.s32.totalorder %s25, 1
      %p48 = por %p46, %p47
      %p50 = scmp.ne.s32.totalorder %s33, %s49
      %p51 = scmp.eq.s32.totalorder %s25, 0
      %p52 = por %p50, %p51
      %s54 = sadd.s32 %s53, 1
      %p57 = scmp.eq.s32.totalorder %s19, 1
      %p58 = scmp.ne.s32.totalorder %s53, %s55
      %p59 = scmp.eq.s32.totalorder %s19, 0
      %p60 = por %p58, %p59
      %p61 = scmp.ne.s32.totalorder %s53, %s55
      %p62 = scmp.eq.s32.totalorder %s24, 1
      %p63 = por %p61, %p62
      %p64 = scmp.ne.s32.totalorder %s55, %s56
      %p65 = scmp.eq.s32.totalorder %s24, 0
      %p66 = por %p64, %p65
      %p67 = scmp.ne.s32.totalorder %s55, %s56
      %p68 = scmp.eq.s32.totalorder %s25, 1
      %p69 = por %p67, %p68
      %p71 = scmp.ne.s32.totalorder %s56, %s70
      %p72 = scmp.eq.s32.totalorder %s25, 0
      %p73 = por %p71, %p72
      %s75 = sadd.s32 %s74, 1
      %p78 = scmp.eq.s32.totalorder %s19, 1
      %p79 = scmp.ne.s32.totalorder %s74, %s76
      %p80 = scmp.eq.s32.totalorder %s19, 0
      %p81 = por %p79, %p80
      %p82 = scmp.ne.s32.totalorder %s74, %s76
      %p83 = scmp.eq.s32.totalorder %s24, 1
      %p84 = por %p82, %p83
      %p85 = scmp.ne.s32.totalorder %s76, %s77
      %p86 = scmp.eq.s32.totalorder %s24, 0
      %p87 = por %p85, %p86
      %p88 = scmp.ne.s32.totalorder %s76, %s77
      %p89 = scmp.eq.s32.totalorder %s25, 1
      %p90 = por %p88, %p89
      %p92 = scmp.ne.s32.totalorder %s77, %s91
      %p93 = scmp.eq.s32.totalorder %s25, 0
      %p94 = por %p92, %p93
      %s96 = sadd.s32 %s95, 1
      %p99 = scmp.eq.s32.totalorder %s19, 1
      %p100 = scmp.ne.s32.totalorder %s95, %s97
      %p101 = scmp.eq.s32.totalorder %s19, 0
      %p102 = por %p100, %p101
      %p103 = scmp.ne.s32.totalorder %s95, %s97
      %p104 = scmp.eq.s32.totalorder %s24, 1
      %p105 = por %p103, %p104
      %p106 = scmp.ne.s32.totalorder %s97, %s98
      %p107 = scmp.eq.s32.totalorder %s24, 0
      %p108 = por %p106, %p107
      %p109 = scmp.ne.s32.totalorder %s97, %s98
      %p110 = scmp.eq.s32.totalorder %s25, 1
      %p111 = por %p109, %p110
      %p113 = scmp.ne.s32.totalorder %s98, %s112
      %p114 = scmp.eq.s32.totalorder %s25, 0
      %p115 = por %p113, %p114
      %s117 = sadd.s32 %s116, 1
      %p120 = scmp.eq.s32.totalorder %s19, 1
      %p121 = scmp.ne.s32.totalorder %s116, %s118
      %p122 = scmp.eq.s32.totalorder %s19, 0
      %p123 = por %p121, %p122
      %p124 = scmp.ne.s32.totalorder %s116, %s118
      %p125 = scmp.eq.s32.totalorder %s24, 1
      %p126 = por %p124, %p125
      %p127 = scmp.ne.s32.totalorder %s118, %s119
      %p128 = scmp.eq.s32.totalorder %s24, 0
      %p129 = por %p127, %p128
      %p130 = scmp.ne.s32.totalorder %s118, %s119
      %p131 = scmp.eq.s32.totalorder %s25, 1
      %p132 = por %p130, %p131
      %p134 = scmp.ne.s32.totalorder %s119, %s133
      %p135 = scmp.eq.s32.totalorder %s25, 0
      %p136 = por %p134, %p135
      %s137 = ssub.s32 %s19, %s26
      %p138 = scmp.eq.s32.totalorder %s137, 0
      %s140 = sadd.s32 %s139, 1
      %s141 = scalar_select %p138, %s139, %s140
      %p144 = pneg %p138
      %p145 = scmp.eq.s32.totalorder %s19, 1
      %p146 = por %p144, %p145
      %p147 = scmp.ne.s32.totalorder %s139, %s142
      %p148 = scmp.eq.s32.totalorder %s19, 0
      %p149 = por %p147, %p148
      %p150 = scmp.ne.s32.totalorder %s139, %s142
      %p151 = scmp.eq.s32.totalorder %s24, 1
      %p152 = por %p150, %p151
      %p153 = scmp.ne.s32.totalorder %s142, %s143
      %p154 = scmp.eq.s32.totalorder %s24, 0
      %p155 = por %p153, %p154
      %p156 = scmp.ne.s32.totalorder %s142, %s143
      %p157 = scmp.eq.s32.totalorder %s25, 1
      %p158 = por %p156, %p157
      %p160 = scmp.ne.s32.totalorder %s143, %s159
      %p161 = scmp.eq.s32.totalorder %s25, 0
      %p162 = por %p160, %p161
      %p163 = scmp.le.s32.totalorder 1, %s19
      %p164 = scmp.lt.s32.totalorder %s19, 3
      %p165 = pnand %p163, %p164
      %p166 = pneg %p165
      // Predicated region
      $region9: #{mlp_forward.1} parent=5 // pred_check
        _
      $region10: #{mlp_forward.1} parent=5 // pred_check_branch
        %168 = sbr.rel (%p165) target = $region12
      $region11: #{mlp_forward.1} parent=5 // pred_region
        %s169 = ssub.s32 %s19, 1
        // Predicated region
        $region13: #{mlp_forward.1} parent=11 // pred_check
          %p170 = pneg %p66
        $region14: #{mlp_forward.1} parent=11 // pred_check_branch
          %172 = sbr.rel (%p170) target = $region16
        $region15: #{mlp_forward.1} parent=11 // pred_region
          %s174 = ssub.s32 512, 512
          %175 = vsyncadd [#allocation6], %s174
          %s176 = sshll.u32 [#allocation5], 4
          %s177 = int_to_ptr.vmem [resolvable:$true] %s176
          %182 = dma.hbm_to_vmem [thread:$0]  %s1, 512, %s177, [#allocation6], 128, 128, 8
        $region16: #{mlp_forward.1} parent=11 // pred_fallthru
          _
        // Predicated region
        $region17: #{mlp_forward.1} parent=11 // pred_check
          %p183 = pneg %p87
        $region18: #{mlp_forward.1} parent=11 // pred_check_branch
          %185 = sbr.rel (%p183) target = $region20
        $region19: #{mlp_forward.1} parent=11 // pred_region
          %s187 = ssub.s32 16, 16
          %188 = vsyncadd [#allocation6], %s187
          %s190 = sshll.u32 [#allocation7], 4
          %s191 = int_to_ptr.vmem [resolvable:$true] %s190
          %193 = dma.hbm_to_vmem [thread:$0]  %s2, 16, %s191, [#allocation6]
        $region20: #{mlp_forward.1} parent=11 // pred_fallthru
          _
        // Predicated region
        $region21: #{mlp_forward.1} parent=11 // pred_check
          %p194 = pneg %p108
        $region22: #{mlp_forward.1} parent=11 // pred_check_branch
          %196 = sbr.rel (%p194) target = $region24
        $region23: #{mlp_forward.1} parent=11 // pred_region
          %s198 = ssub.s32 1024, 1024
          %199 = vsyncadd [#allocation9], %s198
          %s200 = sshll.u32 [#allocation8], 4
          %s201 = int_to_ptr.vmem [resolvable:$true] %s200
          %206 = dma.hbm_to_vmem [thread:$0]  %s3, 1024, %s201, [#allocation9], 128, 128, 8
        $region24: #{mlp_forward.1} parent=11 // pred_fallthru
          _
        // Predicated region
        $region25: #{mlp_forward.1} parent=11 // pred_check
          %p207 = pneg %p129
        $region26: #{mlp_forward.1} parent=11 // pred_check_branch
          %209 = sbr.rel (%p207) target = $region28
        $region27: #{mlp_forward.1} parent=11 // pred_region
          %s211 = ssub.s32 16, 16
          %212 = vsyncadd [#allocation9], %s211
          %s214 = sshll.u32 [#allocation10], 4
          %s215 = int_to_ptr.vmem [resolvable:$true] %s214
          %217 = dma.hbm_to_vmem [thread:$0]  %s4, 16, %s215, [#allocation9]
        $region28: #{mlp_forward.1} parent=11 // pred_fallthru
          _
      $region12: #{mlp_forward.1} parent=5 // pred_fallthru
        _
      %p218 = scmp.lt.s32.totalorder %s19, 2
      // Predicated region
      $region29: #{mlp_forward.1} parent=5 // pred_check
        %p219 = pneg %p218
      $region30: #{mlp_forward.1} parent=5 // pred_check_branch
        %221 = sbr.rel (%p219) target = $region32
      $region31: #{mlp_forward.1} parent=5 // pred_region
        // Predicated region
        $region33: #{mlp_forward.1} parent=31 // pred_check
          %p222 = pneg %p39
        $region34: #{mlp_forward.1} parent=31 // pred_check_branch
          %224 = sbr.rel (%p222) target = $region36
        $region35: #{mlp_forward.1} parent=31 // pred_region
          %s225 = sand.u32 %s29, 1
          %s226 = scalar_lea.sflag [#allocation3], %s225
          %s227 = sand.u32 %s29, 1
          %s228 = smul.addr %s227, 8
          %s229 = scalar_lea.vmem [#allocation2], %s228
          %s231 = ssub.s32 128, 128
          %232 = vsyncadd %s226, %s231
          %s233 = smul.addr %s19, 128
          %s234 = scalar_lea.hbm %s0, %s233
          %s236 = sshll.u32 %s229, 4
          %s237 = int_to_ptr.vmem [resolvable:$true] %s236
          %239 = dma.hbm_to_vmem [thread:$0]  %s234, 128, %s237, %s226
        $region36: #{mlp_forward.1} parent=31 // pred_fallthru
          _
      $region32: #{mlp_forward.1} parent=5 // pred_fallthru
        _
      %p240 = scmp.le.s32.totalorder 1, %s19
      %p241 = scmp.lt.s32.totalorder %s19, 3
      %p242 = pnand %p240, %p241
      %p243 = pneg %p242
      // Predicated region
      $region37: #{mlp_forward.1} parent=5 // pred_check
        _
      $region38: #{mlp_forward.1} parent=5 // pred_check_branch
        %245 = sbr.rel (%p242) target = $region40
      $region39: #{mlp_forward.1} parent=5 // pred_region
        %s246 = ssub.s32 %s19, 1
        %s247 = sand.u32 %s32, 1
        %s248 = scalar_lea.sflag [#allocation3], %s247
        %s249 = sand.u32 %s32, 1
        %s250 = smul.addr %s249, 8
        %s251 = scalar_lea.vmem [#allocation2], %s250
        // Predicated region
        $region41: #{mlp_forward.1} parent=39 // pred_check
          %p252 = pneg %p45
        $region42: #{mlp_forward.1} parent=39 // pred_check_branch
          %254 = sbr.rel (%p252) target = $region44
        $region43: #{mlp_forward.1} parent=39 // pred_region
          %255 = dma.done %s248, 128
        $region44: #{mlp_forward.1} parent=39 // pred_fallthru
          _
        // Predicated region
        $region45: #{mlp_forward.1} parent=39 // pred_check
          %p256 = pneg %p66
        $region46: #{mlp_forward.1} parent=39 // pred_check_branch
          %258 = sbr.rel (%p256) target = $region48
        $region47: #{mlp_forward.1} parent=39 // pred_region
          %259 = dma.done [#allocation6], 512
        $region48: #{mlp_forward.1} parent=39 // pred_fallthru
          _
        // Predicated region
        $region49: #{mlp_forward.1} parent=39 // pred_check
          %p260 = pneg %p87
        $region50: #{mlp_forward.1} parent=39 // pred_check_branch
          %262 = sbr.rel (%p260) target = $region52
        $region51: #{mlp_forward.1} parent=39 // pred_region
          %263 = dma.done [#allocation6], 16
        $region52: #{mlp_forward.1} parent=39 // pred_fallthru
          _
        // Predicated region
        $region53: #{mlp_forward.1} parent=39 // pred_check
          %p264 = pneg %p108
        $region54: #{mlp_forward.1} parent=39 // pred_check_branch
          %266 = sbr.rel (%p264) target = $region56
        $region55: #{mlp_forward.1} parent=39 // pred_region
          %267 = dma.done [#allocation9], 1024
        $region56: #{mlp_forward.1} parent=39 // pred_fallthru
          _
        // Predicated region
        $region57: #{mlp_forward.1} parent=39 // pred_check
          %p268 = pneg %p129
        $region58: #{mlp_forward.1} parent=39 // pred_check_branch
          %270 = sbr.rel (%p268) target = $region60
        $region59: #{mlp_forward.1} parent=39 // pred_region
          %271 = dma.done [#allocation9], 16
        $region60: #{mlp_forward.1} parent=39 // pred_fallthru
          _
        %s272 = sand.u32 %s32, 1
        %s273 = scalar_lea.sflag [#allocation3], %s272
        %s274 = sand.u32 %s32, 1
        %s275 = smul.addr %s274, 8
        %s276 = scalar_lea.vmem [#allocation2], %s275
        %p277 = pneg %p45
        %p278 = pneg %p42
        %p279 = pneg %p66
        %p280 = pneg %p63
        %p281 = pneg %p87
        %p282 = pneg %p84
        %p283 = pneg %p108
        %p284 = pneg %p105
        %p285 = pneg %p129
        %p286 = pneg %p126
        %p287 = pneg %p155
        %p288 = pneg %p152
        %s289 = sand.u32 %s142, 1
        %s290 = scalar_lea.sflag [#allocation4], %s289
        %s291 = sand.u32 %s142, 1
        %s292 = smul.addr %s291, 8
        %s293 = scalar_lea.vmem [#allocation11], %s292
        %v294 = vld [vmem:[%s251] sm:$0xff]
        %v295 = vld [vmem:[#allocation5] sm:$0xff]
        %v296 = vld [vmem:[#allocation5 + $0x8] sm:$0xff]
        %v297 = vld [vmem:[#allocation5 + $0x10] sm:$0xff]
        %v298 = vld [vmem:[#allocation5 + $0x18] sm:$0xff]
        %v299 = vld [vmem:[#allocation7] sm:$0x1]
        %v301 = vlaneseq
        %v302 = vshrl.u32 %v301, 7
        %v303 = vsub.s32 0, %v302
        %v304 = vrot.slane %v299, %v303
        %vm306 = vcmask 261120
        %v308 = vsel %vm306, %v294, 0
        %310 = vmatprep.subr.mxu0 0.0
        %311 = vmatpush1.msra.mxu0 %v295
        %312 = vmatprep.subr.mxu0 0.0
        %313 = vmatpush1.msra.mxu0 %v296
        %314 = vmatprep.subr.mxu0 0.0
        %315 = vmatpush1.msra.mxu0 %v297
        %316 = vmatprep.subr.mxu0 0.0
        %317 = vmatpush1.msra.mxu0 %v298
        %318 = vmatprep.subr.mxu0 0.0
        %319 = vmatpush1.msra.mxu0 0.0
        %320 = vmatprep.subr.mxu0 0.0
        %321 = vmatpush1.msra.mxu0 0.0
        %322 = vmatprep.subr.mxu0 0.0
        %323 = vmatpush1.msra.mxu0 0.0
        %324 = vmatprep.subr.mxu0 0.0
        %325 = vmatpush1.msra.mxu0 0.0
        %326 = vmatprep.subr.mxu0 0.0
        %327 = vmatpush1.msra.mxu0 0.0
        %328 = vmatprep.subr.mxu0 0.0
        %329 = vmatpush1.msra.mxu0 0.0
        %330 = vmatprep.subr.mxu0 0.0
        %331 = vmatpush1.msra.mxu0 0.0
        %332 = vmatprep.subr.mxu0 0.0
        %333 = vmatpush1.msra.mxu0 0.0
        %334 = vmatprep.subr.mxu0 0.0
        %335 = vmatpush1.msra.mxu0 0.0
        %336 = vmatprep.subr.mxu0 0.0
        %337 = vmatpush1.msra.mxu0 0.0
        %338 = vmatprep.subr.mxu0 0.0
        %339 = vmatpush1.msra.mxu0 0.0
        %340 = vmatprep.subr.mxu0 0.0
        %341 = vmatpush1.msra.mxu0 0.0
        %342 = vmatprep.subr.mxu0 0.0
        %343 = vmatpush1.msra.mxu0 0.0
        %344 = vmatprep.subr.mxu0 0.0
        %345 = vmatpush1.msra.mxu0 0.0
        %346 = vmatprep.subr.mxu0 0.0
        %347 = vmatpush1.msra.mxu0 0.0
        %348 = vmatprep.subr.mxu0 0.0
        %349 = vmatpush1.msra.mxu0 0.0
        %350 = vmatprep.subr.mxu0 0.0
        %351 = vmatpush1.msra.mxu0 0.0
        %352 = vmatprep.subr.mxu0 0.0
        %353 = vmatpush1.msra.mxu0 0.0
        %354 = vmatprep.subr.mxu0 0.0
        %355 = vmatpush1.msra.mxu0 0.0
        %356 = vmatprep.subr.mxu0 0.0
        %357 = vmatpush1.msra.mxu0 0.0
        %358 = vmatprep.subr.mxu0 0.0
        %359 = vmatpush1.msra.mxu0 0.0
        %360 = vmatprep.subr.mxu0 0.0
        %361 = vmatpush1.msra.mxu0 0.0
        %362 = vmatprep.subr.mxu0 0.0
        %363 = vmatpush1.msra.mxu0 0.0
        %364 = vmatprep.subr.mxu0 0.0
        %365 = vmatpush1.msra.mxu0 0.0
        %366 = vmatprep.subr.mxu0 0.0
        %367 = vmatpush1.msra.mxu0 0.0
        %368 = vmatprep.subr.mxu0 0.0
        %369 = vmatpush1.msra.mxu0 0.0
        %370 = vmatprep.subr.mxu0 0.0
        %371 = vmatpush1.msra.mxu0 0.0
        %372 = vmatprep.subr.mxu0 0.0
        %373 = vmatpush1.msra.mxu0 0.0
        %374 = vmatprep.mubr.f32.mxu0 0.0
        %375 = vmatmul.mubr.f32.gmra.mrb[0].mxu0 %v308
        %v376 = vpop.f32.mrb[0].mxu0
        %v377 = vadd.f32 %v304, %v376
        %v378 = vpop.f32.mrb[0].mxu0
        %379 = vdwg.mxu0
        %v380 = vmul.f32 %v377, 0.5
        %v381 = vmul.f32 %v377, 0.70710677
        %v382 = vand.u32 2147483647, %v381
        %v383 = vmul.f32 %v382, 0.3275911
        %v384 = vadd.f32 %v383, 1.0
        %v385 = vrcp.pop %v384
        %v386 = vmul.f32 %v384, %v385
        %v387 = vsub.f32 2.0, %v386
        %v388 = vmul.f32 %v385, %v387
        %v389 = vmul.f32 %v388, 1.0614054
        %v390 = vadd.f32 %v389, -1.4531521
        %v391 = vmul.f32 %v388, %v390
        %v392 = vadd.f32 %v391, 1.4214138
        %v393 = vmul.f32 %v388, %v392
        %v394 = vadd.f32 %v393, -0.28449672
        %v395 = vmul.f32 %v388, %v394
        %v396 = vadd.f32 %v395, 0.2548296
        %v397 = vmul.f32 %v388, %v396
        %v398 = vsub.f32 0.0, %v382
        %v399 = vmul.f32 %v398, %v382
        %v400 = vmul.f32 %v399, 1.442695
        %v401 = vpow.pop %v400
        %v402 = vmul.f32 %v397, %v401
        %v403 = vsub.f32 1.0, %v402
        %vm404 = vcmp.ge.f32.partialorder %v381, 0.0
        %v405 = vsub.f32 0.0, %v403
        %v406 = vsel %vm404, %v403, %v405
        %v407 = vadd.f32 %v406, 1.0
        %v408 = vmul.f32 %v380, %v407
        %v409 = vld [vmem:[#allocation8] sm:$0xff]
        %v410 = vld [vmem:[#allocation8 + $0x8] sm:$0xff]
        %v411 = vld [vmem:[#allocation8 + $0x10] sm:$0xff]
        %v412 = vld [vmem:[#allocation8 + $0x18] sm:$0xff]
        %v413 = vld [vmem:[#allocation8 + $0x20] sm:$0xff]
        %v414 = vld [vmem:[#allocation8 + $0x28] sm:$0xff]
        %v415 = vld [vmem:[#allocation8 + $0x30] sm:$0xff]
        %v416 = vld [vmem:[#allocation8 + $0x38] sm:$0xff]
        %v417 = vld [vmem:[#allocation10] sm:$0x1]
        %v419 = vlaneseq
        %v420 = vshrl.u32 %v419, 7
        %v421 = vsub.s32 0, %v420
        %v422 = vrot.slane %v417, %v421
        %vm424 = vcmask 523264
        %v426 = vsel %vm424, %v408, 0
        %428 = vmatprep.subr.mxu0 0.0
        %429 = vmatpush1.msra.mxu0 %v409
        %430 = vmatprep.subr.mxu0 0.0
        %431 = vmatpush1.msra.mxu0 %v410
        %432 = vmatprep.subr.mxu0 0.0
        %433 = vmatpush1.msra.mxu0 %v411
        %434 = vmatprep.subr.mxu0 0.0
        %435 = vmatpush1.msra.mxu0 %v412
        %436 = vmatprep.subr.mxu0 0.0
        %437 = vmatpush1.msra.mxu0 %v413
        %438 = vmatprep.subr.mxu0 0.0
        %439 = vmatpush1.msra.mxu0 %v414
        %440 = vmatprep.subr.mxu0 0.0
        %441 = vmatpush1.msra.mxu0 %v415
        %442 = vmatprep.subr.mxu0 0.0
        %443 = vmatpush1.msra.mxu0 %v416
        %444 = vmatprep.subr.mxu0 0.0
        %445 = vmatpush1.msra.mxu0 0.0
        %446 = vmatprep.subr.mxu0 0.0
        %447 = vmatpush1.msra.mxu0 0.0
        %448 = vmatprep.subr.mxu0 0.0
        %449 = vmatpush1.msra.mxu0 0.0
        %450 = vmatprep.subr.mxu0 0.0
        %451 = vmatpush1.msra.mxu0 0.0
        %452 = vmatprep.subr.mxu0 0.0
        %453 = vmatpush1.msra.mxu0 0.0
        %454 = vmatprep.subr.mxu0 0.0
        %455 = vmatpush1.msra.mxu0 0.0
        %456 = vmatprep.subr.mxu0 0.0
        %457 = vmatpush1.msra.mxu0 0.0
        %458 = vmatprep.subr.mxu0 0.0
        %459 = vmatpush1.msra.mxu0 0.0
        %460 = vmatprep.subr.mxu0 0.0
        %461 = vmatpush1.msra.mxu0 0.0
        %462 = vmatprep.subr.mxu0 0.0
        %463 = vmatpush1.msra.mxu0 0.0
        %464 = vmatprep.subr.mxu0 0.0
        %465 = vmatpush1.msra.mxu0 0.0
        %466 = vmatprep.subr.mxu0 0.0
        %467 = vmatpush1.msra.mxu0 0.0
        %468 = vmatprep.subr.mxu0 0.0
        %469 = vmatpush1.msra.mxu0 0.0
        %470 = vmatprep.subr.mxu0 0.0
        %471 = vmatpush1.msra.mxu0 0.0
        %472 = vmatprep.subr.mxu0 0.0
        %473 = vmatpush1.msra.mxu0 0.0
        %474 = vmatprep.subr.mxu0 0.0
        %475 = vmatpush1.msra.mxu0 0.0
        %476 = vmatprep.subr.mxu0 0.0
        %477 = vmatpush1.msra.mxu0 0.0
        %478 = vmatprep.subr.mxu0 0.0
        %479 = vmatpush1.msra.mxu0 0.0
        %480 = vmatprep.subr.mxu0 0.0
        %481 = vmatpush1.msra.mxu0 0.0
        %482 = vmatprep.subr.mxu0 0.0
        %483 = vmatpush1.msra.mxu0 0.0
        %484 = vmatprep.subr.mxu0 0.0
        %485 = vmatpush1.msra.mxu0 0.0
        %486 = vmatprep.subr.mxu0 0.0
        %487 = vmatpush1.msra.mxu0 0.0
        %488 = vmatprep.subr.mxu0 0.0
        %489 = vmatpush1.msra.mxu0 0.0
        %490 = vmatprep.subr.mxu0 0.0
        %491 = vmatpush1.msra.mxu0 0.0
        %492 = vmatprep.mubr.f32.mxu0 0.0
        %493 = vmatmul.mubr.f32.gmra.mrb[0].mxu0 %v426
        %v494 = vpop.f32.mrb[0].mxu0
        %v495 = vadd.f32 %v422, %v494
        %v496 = vpop.f32.mrb[0].mxu0
        %497 = vdwg.mxu0
        %498 = vst.msk [vmem:[%s293] sm:$0xff] %vm306, %v495
        %s499 = sand.u32 %s142, 1
        %s500 = scalar_lea.sflag [#allocation4], %s499
        %s501 = sand.u32 %s142, 1
        %s502 = smul.addr %s501, 8
        %s503 = scalar_lea.vmem [#allocation11], %s502
        // Predicated region
        $region61: #{mlp_forward.1} parent=39 // pred_check
          %p504 = pneg %p152
        $region62: #{mlp_forward.1} parent=39 // pred_check_branch
          %506 = sbr.rel (%p504) target = $region64
        $region63: #{mlp_forward.1} parent=39 // pred_region
          %s508 = ssub.s32 128, 128
          %509 = vsyncadd %s500, %s508
          %s510 = smul.addr %s24, 128
          %s511 = scalar_lea.hbm %s5, %s510
          %s513 = sshll.u32 %s503, 4
          %s514 = int_to_ptr.vmem [resolvable:$true] %s513
          %516 = dma.vmem_to_hbm [thread:$0]  %s514, 128, %s511, %s500
        $region64: #{mlp_forward.1} parent=39 // pred_fallthru
          _
      $region40: #{mlp_forward.1} parent=5 // pred_fallthru
        _
      %p517 = scmp.le.s32.totalorder 2, %s19
      // Predicated region
      $region65: #{mlp_forward.1} parent=5 // pred_check
        %p518 = pneg %p517
      $region66: #{mlp_forward.1} parent=5 // pred_check_branch
        %520 = sbr.rel (%p518) target = $region68
      $region67: #{mlp_forward.1} parent=5 // pred_region
        %s521 = ssub.s32 %s19, 2
        // Predicated region
        $region69: #{mlp_forward.1} parent=67 // pred_check
          %p522 = pneg %p158
        $region70: #{mlp_forward.1} parent=67 // pred_check_branch
          %524 = sbr.rel (%p522) target = $region72
        $region71: #{mlp_forward.1} parent=67 // pred_region
          %s525 = sand.u32 %s143, 1
          %s526 = scalar_lea.sflag [#allocation4], %s525
          %s527 = sand.u32 %s143, 1
          %s528 = smul.addr %s527, 8
          %s529 = scalar_lea.vmem [#allocation11], %s528
          %530 = dma.done %s526, 128
        $region72: #{mlp_forward.1} parent=67 // pred_fallthru
          _
      $region68: #{mlp_forward.1} parent=5 // pred_fallthru
        _
    $region6: #{mlp_forward.1} parent=1 // loop_footer
      %s23 = sadd.s32 1, %s19
    $region7: #{mlp_forward.1} parent=1 // loop_footer_branch
      %18 = sbr.rel target = $region3
    $region8: #{mlp_forward.1} parent=1 // loop_exit
      _
    %531 = vsyncpa [#allocation3], 1
    %s532 = scalar_lea.sflag [#allocation3], 1
    %533 = vsyncpa %s532, 1
    %534 = vsyncpa [#allocation6], 1
    %535 = vsyncpa [#allocation9], 1
    %536 = vsyncpa [#allocation4], 1
    %s537 = scalar_lea.sflag [#allocation4], 1
    %538 = vsyncpa %s537, 1

</llo_original>
